<compile_context>
chip_gen: v5e
topology: v5e:2x2
jax: 0.10.0
libtpu: 0.0.40
codegen_flags: <defaults>
</compile_context>

<pallas_src>
import functools

import numpy as np
import jax
import jax.numpy as jnp
from jax import lax
from jax.experimental import pallas as pl
from jax.experimental.pallas import tpu as pltpu

EPS = 1e-5


# ---------------------------------------------------------------------------
# Host-side constants (tiny; computed once, passed as kernel inputs)
# ---------------------------------------------------------------------------
def _edge_masks(hh, ww):
    """(2, hh*ww) f32.  Row 0 zeroes x==0 (left-neighbour taps wrap to the previous
    row in the pitch-ww flat layout); row 1 zeroes x==ww-1 (right-neighbour taps)."""
    col = np.arange(hh * ww) % ww
    return np.stack([(col != 0), (col != ww - 1)]).astype(np.float32)


def _subsample_matrix(H, W, Ho, Wo):
    """(H*W, Ho*Wo) 0/1 selection matrix: column q = yo*Wo+xo picks flat index
    (2*yo)*W + 2*xo.  Lets the MXU do the stride-2 / ::2,::2 gather exactly."""
    sel = np.zeros((H * W, Ho * Wo), np.float32)
    q = np.arange(Ho * Wo)
    sel[2 * (q // Wo) * W + 2 * (q % Wo), q] = 1.0
    return sel


def _pick_batch_block(n, max_block=8):
    """Largest divisor of n that is <= max_block (amortizes per-grid-step cost)."""
    for cand in range(min(n, max_block), 0, -1):
        if n % cand == 0:
            return cand
    return 1


# ---------------------------------------------------------------------------
# In-kernel helpers
# ---------------------------------------------------------------------------
def _conv3x3_flat(fbuf, wmat, masks, hh, ww, compute_dtype):
    """3x3, stride-1, pad-1 conv on a row-padded flattened buffer.

    fbuf  : (C, (hh+2)*ww + 2) value; rows padded with zeros top/bottom, plus one
            leading and one trailing zero element (pitch = ww, NO column padding).
    wmat  : (Cout, 9*C) folded weights, columns ordered (ky, kx, c).
    masks : (2, hh*ww) column-edge masks (left-valid, right-valid).
    Returns (Cout, hh*ww) f32.  All 9 taps are contiguous lane slices; the single
    fused dot replaces 9 small dots + 9 VPU accumulates.
    """
    m = hh * ww
    terms = []
    for dy in range(3):
        for dx in range(3):
            off = dy * ww + dx
            sl = fbuf[:, off:off + m]
            if dx == 0:                       # wrapped read at x==0 -> mask
                sl = sl * masks[0:1, :]
            elif dx == 2:                     # wrapped read at x==ww-1 -> mask
                sl = sl * masks[1:2, :]
            terms.append(sl)
    patches = jnp.concatenate(terms, axis=0)                  # (9*C, m)
    return jnp.dot(wmat.astype(compute_dtype), patches.astype(compute_dtype),
                   preferred_element_type=jnp.float32)


def _residual_kernel(*refs, nb, stride, widen, H, W, Ho, Wo, Cin, Cout,
                     compute_dtype):
    """Fused conv1+BN1+ReLU -> conv2+BN2 -> shortcut add -> ReLU for `nb` images."""
    if stride == 2:
        (x_ref, m1_ref, m2_ref, s_ref,
         w1_ref, b1_ref, w2_ref, b2_ref, o_ref) = refs
    else:
        (x_ref, m1_ref,
         w1_ref, b1_ref, w2_ref, b2_ref, o_ref) = refs

    Mo = Ho * Wo
    m1 = m1_ref[...]                                           # (2, H*W)
    w1 = w1_ref[...]                                           # (Cout, 9*Cin)
    b1 = b1_ref[...]                                           # (Cout, 1)
    w2 = w2_ref[...]                                           # (Cout, 9*Cout)
    b2 = b2_ref[...]                                           # (Cout, 1)

    zpad1 = jnp.zeros((Cin, W + 1), jnp.float32)               # tiny border zeros only
    zpad2 = jnp.zeros((Cout, Wo + 1), jnp.float32)

    for b in range(nb):                                        # static unroll, nb small
        xf = x_ref[b]                                          # (Cin, H*W) flat NCHW
        f1 = jnp.concatenate([zpad1, xf, zpad1], axis=1)       # row-padded flat input
        h_raw = _conv3x3_flat(f1, w1, m1, H, W, compute_dtype)  # (Cout, H*W) pre-bias

        if stride == 2:
            # Stride-2 conv1 output == stride-1 output at even (y, x); gather it and
            # the ::2,::2 shortcut with one selection matmul on the idle MXU.
            stacked = jnp.concatenate([h_raw, xf], axis=0)     # (Cout+Cin, H*W)
            sub = jnp.dot(stacked.astype(compute_dtype),
                          s_ref[...].astype(compute_dtype),
                          preferred_element_type=jnp.float32)  # (Cout+Cin, Ho*Wo)
            h_pre, x_sc = sub[:Cout], sub[Cout:]
            conv2_masks = m2_ref[...]
        else:
            h_pre, x_sc = h_raw, xf
            conv2_masks = m1

        h = jnp.maximum(h_pre + b1, 0.0)                       # conv1 + BN1 + ReLU
        f2 = jnp.concatenate([zpad2, h, zpad2], axis=1)        # row-padded activation
        out2 = _conv3x3_flat(f2, w2, conv2_masks, Ho, Wo, compute_dtype) + b2

        if widen:
            # torch: cat([x[:, :, ::2, ::2], zeros], dim=1) -- zero-extend in registers
            # so the epilogue is a single full-width store.
            x_sc = jnp.concatenate(
                [x_sc, jnp.zeros((Cout - Cin, Mo), jnp.float32)], axis=0)

        o_ref[b] = jnp.maximum(out2 + x_sc, 0.0).astype(o_ref.dtype)


# ---------------------------------------------------------------------------
# Wrapper: free reshapes only, one pallas_call
# ---------------------------------------------------------------------------
def residual_forward(x_nchw, fp, *, stride, compute_dtype=jnp.float32,
                     batch_block=None):
    """x_nchw: (N, Cin, H, W) float32.  Returns (N, Cout, Ho, Wo) float32 (NCHW)."""
    N, Cin, H, W = x_nchw.shape
    Cout = fp["w1"].shape[0]
    widen = (Cin != Cout)
    if widen:
        assert stride == 2 and Cout == 2 * Cin, "module supports out=2*in only with stride=2"
    else:
        assert stride == 1, "identity shortcut requires stride=1"
    if stride == 2:
        assert H % 2 == 0 and W % 2 == 0
    Ho, Wo = H // stride, W // stride
    M, Mo = H * W, Ho * Wo

    nb = batch_block if batch_block is not None else _pick_batch_block(N)
    assert N % nb == 0

    x_flat = x_nchw.reshape(N, Cin, M)        # free reshape: NCHW with HW on lanes

    inputs = [x_flat, jnp.asarray(_edge_masks(H, W))]
    in_specs = [
        pl.BlockSpec((nb, Cin, M), lambda n: (n, 0, 0)),
        pl.BlockSpec((2, M), lambda n: (0, 0)),
    ]
    if stride == 2:
        inputs += [jnp.asarray(_edge_masks(Ho, Wo)),
                   jnp.asarray(_subsample_matrix(H, W, Ho, Wo))]
        in_specs += [pl.BlockSpec((2, Mo), lambda n: (0, 0)),
                     pl.BlockSpec((M, Mo), lambda n: (0, 0))]
    inputs += [fp["w1"], fp["b1"], fp["w2"], fp["b2"]]
    in_specs += [pl.BlockSpec((Cout, 9 * Cin), lambda n: (0, 0)),
                 pl.BlockSpec((Cout, 1), lambda n: (0, 0)),
                 pl.BlockSpec((Cout, 9 * Cout), lambda n: (0, 0)),
                 pl.BlockSpec((Cout, 1), lambda n: (0, 0))]

    kernel = functools.partial(
        _residual_kernel, nb=nb, stride=stride, widen=widen,
        H=H, W=W, Ho=Ho, Wo=Wo, Cin=Cin, Cout=Cout, compute_dtype=compute_dtype)

    out_flat = pl.pallas_call(
        kernel,
        out_shape=jax.ShapeDtypeStruct((N, Cout, Mo), jnp.float32),
        grid=(N // nb,),
        in_specs=in_specs,
        out_specs=pl.BlockSpec((nb, Cout, Mo), lambda n: (n, 0, 0)),
        compiler_params=pltpu.CompilerParams(dimension_semantics=("parallel",)),
    )(*inputs)

    # (N, Cout, Ho*Wo) is already NCHW-ordered: the final reshape is free metadata.
    return out_flat.reshape(N, Cout, Ho, Wo)


# ---------------------------------------------------------------------------
# Parameters (synthetic, deterministic) + BN folding + pure-JAX reference
# ---------------------------------------------------------------------------
def init_residual_params(key, cin, cout):
    def conv_bn(k, ci, co):
        kw, kb, kg, kbe, km, kv = jax.random.split(k, 6)
        return dict(
            w=jax.random.normal(kw, (3, 3, ci, co), jnp.float32) / jnp.sqrt(9.0 * ci),
            b=0.1 * jax.random.normal(kb, (co,), jnp.float32),
            gamma=1.0 + 0.1 * jax.random.normal(kg, (co,), jnp.float32),
            beta=0.1 * jax.random.normal(kbe, (co,), jnp.float32),
            mean=0.1 * jax.random.normal(km, (co,), jnp.float32),
            var=1.0 + 0.1 * jax.random.uniform(kv, (co,), jnp.float32),
        )
    k1, k2 = jax.random.split(key)
    return dict(conv1=conv_bn(k1, cin, cout), conv2=conv_bn(k2, cout, cout))


def fold_params(p):
    """Fold inference-mode BN into conv weight/bias; layout for the kernel:
    w: (Cout, 9*Cin) with columns ordered (ky, kx, cin); b: (Cout, 1)."""
    def fold(cp):
        scale = cp["gamma"] / jnp.sqrt(cp["var"] + EPS)            # (co,)
        w = cp["w"] * scale                                        # (3,3,ci,co)
        b = (cp["b"] - cp["mean"]) * scale + cp["beta"]            # (co,)
        co = cp["w"].shape[3]
        wmat = jnp.transpose(w, (3, 0, 1, 2)).reshape(co, -1)      # (co, 9*ci)
        return wmat, b.reshape(co, 1)
    w1, b1 = fold(p["conv1"])
    w2, b2 = fold(p["conv2"])
    return dict(w1=w1, b1=b1, w2=w2, b2=b2)


def residual_ref(x_nchw, p, *, stride):
    """Pure-JAX reference mirroring the PyTorch module (inference-mode BN)."""
    def conv_bn(x, cp, s):
        y = lax.conv_general_dilated(
            x, cp["w"], window_strides=(s, s), padding=((1, 1), (1, 1)),
            dimension_numbers=("NCHW", "HWIO", "NCHW"),
            precision=lax.Precision.HIGHEST)
        y = y + cp["b"][None, :, None, None]
        inv = (cp["gamma"] / jnp.sqrt(cp["var"] + EPS))[None, :, None, None]
        return (y - cp["mean"][None, :, None, None]) * inv + cp["beta"][None, :, None, None]

    out = jax.nn.relu(conv_bn(x_nchw, p["conv1"], stride))
    out = conv_bn(out, p["conv2"], 1)
    cout = p["conv1"]["w"].shape[-1]
    if x_nchw.shape[1] != cout:
        xs = x_nchw[:, :, ::2, ::2]
        x_new = jnp.concatenate([xs, jnp.zeros_like(xs)], axis=1)
    else:
        x_new = x_nchw
    return jax.nn.relu(out + x_new)


# ---------------------------------------------------------------------------
if __name__ == "__main__":
    key = jax.random.PRNGKey(0)
    kx, kp1, kp2 = jax.random.split(key, 3)

    N, C, H, W = 2, 4, 16, 16
    x = jax.random.normal(kx, (N, C, H, W), jnp.float32)          # NCHW like PyTorch

    # Case 1: identity shortcut (in_channels == out_channels, stride=1).
    p1 = init_residual_params(kp1, C, C)
    fwd1 = jax.jit(functools.partial(residual_forward, stride=1))
    out1 = jax.block_until_ready(fwd1(x, fold_params(p1)))
    ref1 = residual_ref(x, p1, stride=1)
    assert out1.shape == (N, C, H, W), out1.shape
    assert bool(jnp.all(jnp.isfinite(out1)))
    err1 = float(jnp.max(jnp.abs(out1 - ref1)))
    assert err1 < 5e-2, f"identity-shortcut mismatch: {err1}"

    # Case 2: downsampling + channel-widening shortcut (out = 2*in, stride=2).
    p2 = init_residual_params(kp2, C, 2 * C)
    fwd2 = jax.jit(functools.partial(residual_forward, stride=2))
    out2 = jax.block_until_ready(fwd2(x, fold_params(p2)))
    ref2 = residual_ref(x, p2, stride=2)
    assert out2.shape == (N, 2 * C, H // 2, W // 2), out2.shape
    assert bool(jnp.all(jnp.isfinite(out2)))
    err2 = float(jnp.max(jnp.abs(out2 - ref2)))
    assert err2 < 5e-2, f"widening-shortcut mismatch: {err2}"

    print("KERNEL_OK")
</pallas_src>

<mosaic_0001>
module attributes {stable_mosaic.version = 11 : i64} {
  func.func @_residual_kernel(%arg0: i32, %arg1: memref<2x4x256xf32, #tpu.memory_space<vmem>>, %arg2: memref<2x256xf32, #tpu.memory_space<vmem>>, %arg3: memref<4x36xf32, #tpu.memory_space<vmem>>, %arg4: memref<4x1xf32, #tpu.memory_space<vmem>>, %arg5: memref<4x36xf32, #tpu.memory_space<vmem>>, %arg6: memref<4x1xf32, #tpu.memory_space<vmem>>, %arg7: memref<2x4x256xf32, #tpu.memory_space<vmem>>) attributes {dimension_semantics = [#tpu.dimension_semantics<parallel>], iteration_bounds = array<i64: 1>, scalar_prefetch = 0 : i64, scratch_operands = 0 : i64, tpu.core_type = #tpu.core_type<tc>, window_params = [{transform_indices = @transform_0, window_bounds = array<i64: 2, 4, 256>}, {pipeline_mode = #tpu.pipeline_mode<synchronous>, transform_indices = @transform_1, window_bounds = array<i64: 2, 256>}, {pipeline_mode = #tpu.pipeline_mode<synchronous>, transform_indices = @transform_2, window_bounds = array<i64: 4, 36>}, {pipeline_mode = #tpu.pipeline_mode<synchronous>, transform_indices = @transform_3, window_bounds = array<i64: 4, 1>}, {pipeline_mode = #tpu.pipeline_mode<synchronous>, transform_indices = @transform_4, window_bounds = array<i64: 4, 36>}, {pipeline_mode = #tpu.pipeline_mode<synchronous>, transform_indices = @transform_5, window_bounds = array<i64: 4, 1>}, {transform_indices = @transform_6, window_bounds = array<i64: 2, 4, 256>}]} {
    %c0 = arith.constant 0 : index
    %c0_0 = arith.constant 0 : index
    %0 = vector.load %arg2[%c0, %c0_0] : memref<2x256xf32, #tpu.memory_space<vmem>>, vector<2x256xf32>
    %c0_1 = arith.constant 0 : index
    %c0_2 = arith.constant 0 : index
    %1 = vector.load %arg3[%c0_1, %c0_2] : memref<4x36xf32, #tpu.memory_space<vmem>>, vector<4x36xf32>
    %c0_3 = arith.constant 0 : index
    %c0_4 = arith.constant 0 : index
    %2 = vector.load %arg4[%c0_3, %c0_4] : memref<4x1xf32, #tpu.memory_space<vmem>>, vector<4x1xf32>
    %c0_5 = arith.constant 0 : index
    %c0_6 = arith.constant 0 : index
    %3 = vector.load %arg5[%c0_5, %c0_6] : memref<4x36xf32, #tpu.memory_space<vmem>>, vector<4x36xf32>
    %c0_7 = arith.constant 0 : index
    %c0_8 = arith.constant 0 : index
    %4 = vector.load %arg6[%c0_7, %c0_8] : memref<4x1xf32, #tpu.memory_space<vmem>>, vector<4x1xf32>
    %cst = arith.constant 0.000000e+00 : f32
    %5 = vector.broadcast %cst : f32 to vector<4x17xf32>
    %cst_9 = arith.constant 0.000000e+00 : f32
    %6 = vector.broadcast %cst_9 : f32 to vector<4x17xf32>
    %c0_10 = arith.constant 0 : index
    %c0_11 = arith.constant 0 : index
    %c0_12 = arith.constant 0 : index
    %7 = vector.load %arg1[%c0_10, %c0_11, %c0_12] : memref<2x4x256xf32, #tpu.memory_space<vmem>>, vector<1x4x256xf32>
    %8 = vector.shape_cast %7 : vector<1x4x256xf32> to vector<4x256xf32>
    %9 = tpu.concatenate %5, %8, %5 in 1 : vector<4x17xf32>, vector<4x256xf32>, vector<4x17xf32> -> vector<4x290xf32>
    %10 = vector.extract_strided_slice %9 {offsets = [0, 0], sizes = [4, 256], strides = [1, 1]} : vector<4x290xf32> to vector<4x256xf32>
    %11 = vector.extract_strided_slice %0 {offsets = [0, 0], sizes = [1, 256], strides = [1, 1]} : vector<2x256xf32> to vector<1x256xf32>
    %12 = vector.broadcast %11 : vector<1x256xf32> to vector<4x256xf32>
    %13 = arith.mulf %10, %12 : vector<4x256xf32>
    %14 = vector.extract_strided_slice %9 {offsets = [0, 1], sizes = [4, 256], strides = [1, 1]} : vector<4x290xf32> to vector<4x256xf32>
    %15 = vector.extract_strided_slice %9 {offsets = [0, 2], sizes = [4, 256], strides = [1, 1]} : vector<4x290xf32> to vector<4x256xf32>
    %16 = vector.extract_strided_slice %0 {offsets = [1, 0], sizes = [1, 256], strides = [1, 1]} : vector<2x256xf32> to vector<1x256xf32>
    %17 = vector.broadcast %16 : vector<1x256xf32> to vector<4x256xf32>
    %18 = arith.mulf %15, %17 : vector<4x256xf32>
    %19 = vector.extract_strided_slice %9 {offsets = [0, 16], sizes = [4, 256], strides = [1, 1]} : vector<4x290xf32> to vector<4x256xf32>
    %20 = vector.extract_strided_slice %0 {offsets = [0, 0], sizes = [1, 256], strides = [1, 1]} : vector<2x256xf32> to vector<1x256xf32>
    %21 = vector.broadcast %20 : vector<1x256xf32> to vector<4x256xf32>
    %22 = arith.mulf %19, %21 : vector<4x256xf32>
    %23 = vector.extract_strided_slice %9 {offsets = [0, 17], sizes = [4, 256], strides = [1, 1]} : vector<4x290xf32> to vector<4x256xf32>
    %24 = vector.extract_strided_slice %9 {offsets = [0, 18], sizes = [4, 256], strides = [1, 1]} : vector<4x290xf32> to vector<4x256xf32>
    %25 = vector.extract_strided_slice %0 {offsets = [1, 0], sizes = [1, 256], strides = [1, 1]} : vector<2x256xf32> to vector<1x256xf32>
    %26 = vector.broadcast %25 : vector<1x256xf32> to vector<4x256xf32>
    %27 = arith.mulf %24, %26 : vector<4x256xf32>
    %28 = vector.extract_strided_slice %9 {offsets = [0, 32], sizes = [4, 256], strides = [1, 1]} : vector<4x290xf32> to vector<4x256xf32>
    %29 = vector.extract_strided_slice %0 {offsets = [0, 0], sizes = [1, 256], strides = [1, 1]} : vector<2x256xf32> to vector<1x256xf32>
    %30 = vector.broadcast %29 : vector<1x256xf32> to vector<4x256xf32>
    %31 = arith.mulf %28, %30 : vector<4x256xf32>
    %32 = vector.extract_strided_slice %9 {offsets = [0, 33], sizes = [4, 256], strides = [1, 1]} : vector<4x290xf32> to vector<4x256xf32>
    %33 = vector.extract_strided_slice %9 {offsets = [0, 34], sizes = [4, 256], strides = [1, 1]} : vector<4x290xf32> to vector<4x256xf32>
    %34 = vector.extract_strided_slice %0 {offsets = [1, 0], sizes = [1, 256], strides = [1, 1]} : vector<2x256xf32> to vector<1x256xf32>
    %35 = vector.broadcast %34 : vector<1x256xf32> to vector<4x256xf32>
    %36 = arith.mulf %33, %35 : vector<4x256xf32>
    %37 = tpu.concatenate %13, %14, %18, %22, %23, %27, %31, %32, %36 in 0 : vector<4x256xf32>, vector<4x256xf32>, vector<4x256xf32>, vector<4x256xf32>, vector<4x256xf32>, vector<4x256xf32>, vector<4x256xf32>, vector<4x256xf32>, vector<4x256xf32> -> vector<36x256xf32>
    %cst_13 = arith.constant dense<0.000000e+00> : vector<4x256xf32>
    %38 = tpu.matmul %1, %37, %cst_13 {dimension_numbers = #tpu.dot_dimension_numbers<[1], [0], [0], [1], [0, 0, 1, 1], [], []>} : vector<4x36xf32>, vector<36x256xf32>, vector<4x256xf32> -> vector<4x256xf32>
    %39 = vector.broadcast %2 : vector<4x1xf32> to vector<4x256xf32>
    %40 = arith.addf %38, %39 : vector<4x256xf32>
    %cst_14 = arith.constant 0.000000e+00 : f32
    %41 = vector.broadcast %cst_14 : f32 to vector<4x256xf32>
    %42 = arith.maximumf %40, %41 : vector<4x256xf32>
    %43 = tpu.concatenate %6, %42, %6 in 1 : vector<4x17xf32>, vector<4x256xf32>, vector<4x17xf32> -> vector<4x290xf32>
    %44 = vector.extract_strided_slice %43 {offsets = [0, 0], sizes = [4, 256], strides = [1, 1]} : vector<4x290xf32> to vector<4x256xf32>
    %45 = vector.extract_strided_slice %0 {offsets = [0, 0], sizes = [1, 256], strides = [1, 1]} : vector<2x256xf32> to vector<1x256xf32>
    %46 = vector.broadcast %45 : vector<1x256xf32> to vector<4x256xf32>
    %47 = arith.mulf %44, %46 : vector<4x256xf32>
    %48 = vector.extract_strided_slice %43 {offsets = [0, 1], sizes = [4, 256], strides = [1, 1]} : vector<4x290xf32> to vector<4x256xf32>
    %49 = vector.extract_strided_slice %43 {offsets = [0, 2], sizes = [4, 256], strides = [1, 1]} : vector<4x290xf32> to vector<4x256xf32>
    %50 = vector.extract_strided_slice %0 {offsets = [1, 0], sizes = [1, 256], strides = [1, 1]} : vector<2x256xf32> to vector<1x256xf32>
    %51 = vector.broadcast %50 : vector<1x256xf32> to vector<4x256xf32>
    %52 = arith.mulf %49, %51 : vector<4x256xf32>
    %53 = vector.extract_strided_slice %43 {offsets = [0, 16], sizes = [4, 256], strides = [1, 1]} : vector<4x290xf32> to vector<4x256xf32>
    %54 = vector.extract_strided_slice %0 {offsets = [0, 0], sizes = [1, 256], strides = [1, 1]} : vector<2x256xf32> to vector<1x256xf32>
    %55 = vector.broadcast %54 : vector<1x256xf32> to vector<4x256xf32>
    %56 = arith.mulf %53, %55 : vector<4x256xf32>
    %57 = vector.extract_strided_slice %43 {offsets = [0, 17], sizes = [4, 256], strides = [1, 1]} : vector<4x290xf32> to vector<4x256xf32>
    %58 = vector.extract_strided_slice %43 {offsets = [0, 18], sizes = [4, 256], strides = [1, 1]} : vector<4x290xf32> to vector<4x256xf32>
    %59 = vector.extract_strided_slice %0 {offsets = [1, 0], sizes = [1, 256], strides = [1, 1]} : vector<2x256xf32> to vector<1x256xf32>
    %60 = vector.broadcast %59 : vector<1x256xf32> to vector<4x256xf32>
    %61 = arith.mulf %58, %60 : vector<4x256xf32>
    %62 = vector.extract_strided_slice %43 {offsets = [0, 32], sizes = [4, 256], strides = [1, 1]} : vector<4x290xf32> to vector<4x256xf32>
    %63 = vector.extract_strided_slice %0 {offsets = [0, 0], sizes = [1, 256], strides = [1, 1]} : vector<2x256xf32> to vector<1x256xf32>
    %64 = vector.broadcast %63 : vector<1x256xf32> to vector<4x256xf32>
    %65 = arith.mulf %62, %64 : vector<4x256xf32>
    %66 = vector.extract_strided_slice %43 {offsets = [0, 33], sizes = [4, 256], strides = [1, 1]} : vector<4x290xf32> to vector<4x256xf32>
    %67 = vector.extract_strided_slice %43 {offsets = [0, 34], sizes = [4, 256], strides = [1, 1]} : vector<4x290xf32> to vector<4x256xf32>
    %68 = vector.extract_strided_slice %0 {offsets = [1, 0], sizes = [1, 256], strides = [1, 1]} : vector<2x256xf32> to vector<1x256xf32>
    %69 = vector.broadcast %68 : vector<1x256xf32> to vector<4x256xf32>
    %70 = arith.mulf %67, %69 : vector<4x256xf32>
    %71 = tpu.concatenate %47, %48, %52, %56, %57, %61, %65, %66, %70 in 0 : vector<4x256xf32>, vector<4x256xf32>, vector<4x256xf32>, vector<4x256xf32>, vector<4x256xf32>, vector<4x256xf32>, vector<4x256xf32>, vector<4x256xf32>, vector<4x256xf32> -> vector<36x256xf32>
    %cst_15 = arith.constant dense<0.000000e+00> : vector<4x256xf32>
    %72 = tpu.matmul %3, %71, %cst_15 {dimension_numbers = #tpu.dot_dimension_numbers<[1], [0], [0], [1], [0, 0, 1, 1], [], []>} : vector<4x36xf32>, vector<36x256xf32>, vector<4x256xf32> -> vector<4x256xf32>
    %73 = vector.broadcast %4 : vector<4x1xf32> to vector<4x256xf32>
    %74 = arith.addf %72, %73 : vector<4x256xf32>
    %75 = arith.addf %74, %8 : vector<4x256xf32>
    %cst_16 = arith.constant 0.000000e+00 : f32
    %76 = vector.broadcast %cst_16 : f32 to vector<4x256xf32>
    %77 = arith.maximumf %75, %76 : vector<4x256xf32>
    %c0_17 = arith.constant 0 : index
    %c0_18 = arith.constant 0 : index
    %c0_19 = arith.constant 0 : index
    %78 = vector.load %arg7[%c0_17, %c0_18, %c0_19] : memref<2x4x256xf32, #tpu.memory_space<vmem>>, vector<1x4x256xf32>
    %79 = vector.shape_cast %78 : vector<1x4x256xf32> to vector<4x256xf32>
    %80 = vector.shape_cast %77 : vector<4x256xf32> to vector<1x4x256xf32>
    tpu.vector_store %arg7[%c0_17, %c0_18, %c0_19], %80 {strides = array<i32>} : memref<2x4x256xf32, #tpu.memory_space<vmem>>, vector<1x4x256xf32>,
    %c1 = arith.constant 1 : index
    %c0_20 = arith.constant 0 : index
    %c0_21 = arith.constant 0 : index
    %81 = vector.load %arg1[%c1, %c0_20, %c0_21] : memref<2x4x256xf32, #tpu.memory_space<vmem>>, vector<1x4x256xf32>
    %82 = vector.shape_cast %81 : vector<1x4x256xf32> to vector<4x256xf32>
    %83 = tpu.concatenate %5, %82, %5 in 1 : vector<4x17xf32>, vector<4x256xf32>, vector<4x17xf32> -> vector<4x290xf32>
    %84 = vector.extract_strided_slice %83 {offsets = [0, 0], sizes = [4, 256], strides = [1, 1]} : vector<4x290xf32> to vector<4x256xf32>
    %85 = vector.extract_strided_slice %0 {offsets = [0, 0], sizes = [1, 256], strides = [1, 1]} : vector<2x256xf32> to vector<1x256xf32>
    %86 = vector.broadcast %85 : vector<1x256xf32> to vector<4x256xf32>
    %87 = arith.mulf %84, %86 : vector<4x256xf32>
    %88 = vector.extract_strided_slice %83 {offsets = [0, 1], sizes = [4, 256], strides = [1, 1]} : vector<4x290xf32> to vector<4x256xf32>
    %89 = vector.extract_strided_slice %83 {offsets = [0, 2], sizes = [4, 256], strides = [1, 1]} : vector<4x290xf32> to vector<4x256xf32>
    %90 = vector.extract_strided_slice %0 {offsets = [1, 0], sizes = [1, 256], strides = [1, 1]} : vector<2x256xf32> to vector<1x256xf32>
    %91 = vector.broadcast %90 : vector<1x256xf32> to vector<4x256xf32>
    %92 = arith.mulf %89, %91 : vector<4x256xf32>
    %93 = vector.extract_strided_slice %83 {offsets = [0, 16], sizes = [4, 256], strides = [1, 1]} : vector<4x290xf32> to vector<4x256xf32>
    %94 = vector.extract_strided_slice %0 {offsets = [0, 0], sizes = [1, 256], strides = [1, 1]} : vector<2x256xf32> to vector<1x256xf32>
    %95 = vector.broadcast %94 : vector<1x256xf32> to vector<4x256xf32>
    %96 = arith.mulf %93, %95 : vector<4x256xf32>
    %97 = vector.extract_strided_slice %83 {offsets = [0, 17], sizes = [4, 256], strides = [1, 1]} : vector<4x290xf32> to vector<4x256xf32>
    %98 = vector.extract_strided_slice %83 {offsets = [0, 18], sizes = [4, 256], strides = [1, 1]} : vector<4x290xf32> to vector<4x256xf32>
    %99 = vector.extract_strided_slice %0 {offsets = [1, 0], sizes = [1, 256], strides = [1, 1]} : vector<2x256xf32> to vector<1x256xf32>
    %100 = vector.broadcast %99 : vector<1x256xf32> to vector<4x256xf32>
    %101 = arith.mulf %98, %100 : vector<4x256xf32>
    %102 = vector.extract_strided_slice %83 {offsets = [0, 32], sizes = [4, 256], strides = [1, 1]} : vector<4x290xf32> to vector<4x256xf32>
    %103 = vector.extract_strided_slice %0 {offsets = [0, 0], sizes = [1, 256], strides = [1, 1]} : vector<2x256xf32> to vector<1x256xf32>
    %104 = vector.broadcast %103 : vector<1x256xf32> to vector<4x256xf32>
    %105 = arith.mulf %102, %104 : vector<4x256xf32>
    %106 = vector.extract_strided_slice %83 {offsets = [0, 33], sizes = [4, 256], strides = [1, 1]} : vector<4x290xf32> to vector<4x256xf32>
    %107 = vector.extract_strided_slice %83 {offsets = [0, 34], sizes = [4, 256], strides = [1, 1]} : vector<4x290xf32> to vector<4x256xf32>
    %108 = vector.extract_strided_slice %0 {offsets = [1, 0], sizes = [1, 256], strides = [1, 1]} : vector<2x256xf32> to vector<1x256xf32>
    %109 = vector.broadcast %108 : vector<1x256xf32> to vector<4x256xf32>
    %110 = arith.mulf %107, %109 : vector<4x256xf32>
    %111 = tpu.concatenate %87, %88, %92, %96, %97, %101, %105, %106, %110 in 0 : vector<4x256xf32>, vector<4x256xf32>, vector<4x256xf32>, vector<4x256xf32>, vector<4x256xf32>, vector<4x256xf32>, vector<4x256xf32>, vector<4x256xf32>, vector<4x256xf32> -> vector<36x256xf32>
    %cst_22 = arith.constant dense<0.000000e+00> : vector<4x256xf32>
    %112 = tpu.matmul %1, %111, %cst_22 {dimension_numbers = #tpu.dot_dimension_numbers<[1], [0], [0], [1], [0, 0, 1, 1], [], []>} : vector<4x36xf32>, vector<36x256xf32>, vector<4x256xf32> -> vector<4x256xf32>
    %113 = vector.broadcast %2 : vector<4x1xf32> to vector<4x256xf32>
    %114 = arith.addf %112, %113 : vector<4x256xf32>
    %cst_23 = arith.constant 0.000000e+00 : f32
    %115 = vector.broadcast %cst_23 : f32 to vector<4x256xf32>
    %116 = arith.maximumf %114, %115 : vector<4x256xf32>
    %117 = tpu.concatenate %6, %116, %6 in 1 : vector<4x17xf32>, vector<4x256xf32>, vector<4x17xf32> -> vector<4x290xf32>
    %118 = vector.extract_strided_slice %117 {offsets = [0, 0], sizes = [4, 256], strides = [1, 1]} : vector<4x290xf32> to vector<4x256xf32>
    %119 = vector.extract_strided_slice %0 {offsets = [0, 0], sizes = [1, 256], strides = [1, 1]} : vector<2x256xf32> to vector<1x256xf32>
    %120 = vector.broadcast %119 : vector<1x256xf32> to vector<4x256xf32>
    %121 = arith.mulf %118, %120 : vector<4x256xf32>
    %122 = vector.extract_strided_slice %117 {offsets = [0, 1], sizes = [4, 256], strides = [1, 1]} : vector<4x290xf32> to vector<4x256xf32>
    %123 = vector.extract_strided_slice %117 {offsets = [0, 2], sizes = [4, 256], strides = [1, 1]} : vector<4x290xf32> to vector<4x256xf32>
    %124 = vector.extract_strided_slice %0 {offsets = [1, 0], sizes = [1, 256], strides = [1, 1]} : vector<2x256xf32> to vector<1x256xf32>
    %125 = vector.broadcast %124 : vector<1x256xf32> to vector<4x256xf32>
    %126 = arith.mulf %123, %125 : vector<4x256xf32>
    %127 = vector.extract_strided_slice %117 {offsets = [0, 16], sizes = [4, 256], strides = [1, 1]} : vector<4x290xf32> to vector<4x256xf32>
    %128 = vector.extract_strided_slice %0 {offsets = [0, 0], sizes = [1, 256], strides = [1, 1]} : vector<2x256xf32> to vector<1x256xf32>
    %129 = vector.broadcast %128 : vector<1x256xf32> to vector<4x256xf32>
    %130 = arith.mulf %127, %129 : vector<4x256xf32>
    %131 = vector.extract_strided_slice %117 {offsets = [0, 17], sizes = [4, 256], strides = [1, 1]} : vector<4x290xf32> to vector<4x256xf32>
    %132 = vector.extract_strided_slice %117 {offsets = [0, 18], sizes = [4, 256], strides = [1, 1]} : vector<4x290xf32> to vector<4x256xf32>
    %133 = vector.extract_strided_slice %0 {offsets = [1, 0], sizes = [1, 256], strides = [1, 1]} : vector<2x256xf32> to vector<1x256xf32>
    %134 = vector.broadcast %133 : vector<1x256xf32> to vector<4x256xf32>
    %135 = arith.mulf %132, %134 : vector<4x256xf32>
    %136 = vector.extract_strided_slice %117 {offsets = [0, 32], sizes = [4, 256], strides = [1, 1]} : vector<4x290xf32> to vector<4x256xf32>
    %137 = vector.extract_strided_slice %0 {offsets = [0, 0], sizes = [1, 256], strides = [1, 1]} : vector<2x256xf32> to vector<1x256xf32>
    %138 = vector.broadcast %137 : vector<1x256xf32> to vector<4x256xf32>
    %139 = arith.mulf %136, %138 : vector<4x256xf32>
    %140 = vector.extract_strided_slice %117 {offsets = [0, 33], sizes = [4, 256], strides = [1, 1]} : vector<4x290xf32> to vector<4x256xf32>
    %141 = vector.extract_strided_slice %117 {offsets = [0, 34], sizes = [4, 256], strides = [1, 1]} : vector<4x290xf32> to vector<4x256xf32>
    %142 = vector.extract_strided_slice %0 {offsets = [1, 0], sizes = [1, 256], strides = [1, 1]} : vector<2x256xf32> to vector<1x256xf32>
    %143 = vector.broadcast %142 : vector<1x256xf32> to vector<4x256xf32>
    %144 = arith.mulf %141, %143 : vector<4x256xf32>
    %145 = tpu.concatenate %121, %122, %126, %130, %131, %135, %139, %140, %144 in 0 : vector<4x256xf32>, vector<4x256xf32>, vector<4x256xf32>, vector<4x256xf32>, vector<4x256xf32>, vector<4x256xf32>, vector<4x256xf32>, vector<4x256xf32>, vector<4x256xf32> -> vector<36x256xf32>
    %cst_24 = arith.constant dense<0.000000e+00> : vector<4x256xf32>
    %146 = tpu.matmul %3, %145, %cst_24 {dimension_numbers = #tpu.dot_dimension_numbers<[1], [0], [0], [1], [0, 0, 1, 1], [], []>} : vector<4x36xf32>, vector<36x256xf32>, vector<4x256xf32> -> vector<4x256xf32>
    %147 = vector.broadcast %4 : vector<4x1xf32> to vector<4x256xf32>
    %148 = arith.addf %146, %147 : vector<4x256xf32>
    %149 = arith.addf %148, %82 : vector<4x256xf32>
    %cst_25 = arith.constant 0.000000e+00 : f32
    %150 = vector.broadcast %cst_25 : f32 to vector<4x256xf32>
    %151 = arith.maximumf %149, %150 : vector<4x256xf32>
    %c1_26 = arith.constant 1 : index
    %c0_27 = arith.constant 0 : index
    %c0_28 = arith.constant 0 : index
    %152 = vector.load %arg7[%c1_26, %c0_27, %c0_28] : memref<2x4x256xf32, #tpu.memory_space<vmem>>, vector<1x4x256xf32>
    %153 = vector.shape_cast %152 : vector<1x4x256xf32> to vector<4x256xf32>
    %154 = vector.shape_cast %151 : vector<4x256xf32> to vector<1x4x256xf32>
    tpu.vector_store %arg7[%c1_26, %c0_27, %c0_28], %154 {strides = array<i32>} : memref<2x4x256xf32, #tpu.memory_space<vmem>>, vector<1x4x256xf32>,
    return
  }
  func.func @transform_0(%arg0: i32) -> (i32, i32, i32) {
    %c0_i32 = arith.constant 0 : i32
    %c0_i32_0 = arith.constant 0 : i32
    %c0_i32_1 = arith.constant 0 : i32
    return %arg0, %c0_i32, %c0_i32_0 : i32, i32, i32
  }
  func.func @transform_1(%arg0: i32) -> (i32, i32) {
    %c0_i32 = arith.constant 0 : i32
    %c0_i32_0 = arith.constant 0 : i32
    %c0_i32_1 = arith.constant 0 : i32
    return %c0_i32, %c0_i32_0 : i32, i32
  }
  func.func @transform_2(%arg0: i32) -> (i32, i32) {
    %c0_i32 = arith.constant 0 : i32
    %c0_i32_0 = arith.constant 0 : i32
    %c0_i32_1 = arith.constant 0 : i32
    return %c0_i32, %c0_i32_0 : i32, i32
  }
  func.func @transform_3(%arg0: i32) -> (i32, i32) {
    %c0_i32 = arith.constant 0 : i32
    %c0_i32_0 = arith.constant 0 : i32
    %c0_i32_1 = arith.constant 0 : i32
    return %c0_i32, %c0_i32_0 : i32, i32
  }
  func.func @transform_4(%arg0: i32) -> (i32, i32) {
    %c0_i32 = arith.constant 0 : i32
    %c0_i32_0 = arith.constant 0 : i32
    %c0_i32_1 = arith.constant 0 : i32
    return %c0_i32, %c0_i32_0 : i32, i32
  }
  func.func @transform_5(%arg0: i32) -> (i32, i32) {
    %c0_i32 = arith.constant 0 : i32
    %c0_i32_0 = arith.constant 0 : i32
    %c0_i32_1 = arith.constant 0 : i32
    return %c0_i32, %c0_i32_0 : i32, i32
  }
  func.func @transform_6(%arg0: i32) -> (i32, i32, i32) {
    %c0_i32 = arith.constant 0 : i32
    %c0_i32_0 = arith.constant 0 : i32
    %c0_i32_1 = arith.constant 0 : i32
    return %arg0, %c0_i32, %c0_i32_0 : i32, i32, i32
  }
}

</mosaic_0001>

<llo_original>
// kernel: residual_forward.1
$region0: #{residual_forward.1}
  #allocation0 [shape = 'u32[]', space=smem, size = 0x4, offset = 0x4, fixed_abs, tag = 'smem constant byte address 0x4 - core index']
  #allocation1 [shape = 'u32[72,128]{1,0:T(1,128)}', space=vmem, size = 0x9000, scoped, tag = 'internal scratch']
  %s0 = inlined_call_operand.vmem [shape: f32[2,4,256], index: 0, kind: input, shape index: {}]
  %s1 = inlined_call_operand.vmem [shape: f32[2,256], index: 1, kind: input, shape index: {}]
  %s2 = inlined_call_operand.vmem [shape: f32[4,36], index: 2, kind: input, shape index: {}]
  %s3 = inlined_call_operand.vmem [shape: f32[4,1], index: 3, kind: input, shape index: {}]
  %s4 = inlined_call_operand.vmem [shape: f32[4,36], index: 4, kind: input, shape index: {}]
  %s5 = inlined_call_operand.vmem [shape: f32[4,1], index: 5, kind: input, shape index: {}]
  %s6 = inlined_call_operand.vmem [shape: f32[2,4,256], index: 6, kind: output, shape index: {}]
  %s7 = sld [smem:[#allocation0]]
  $region34: #{residual_forward.1} parent=0
    _
  %s9 = ssub.s32 1, %s7
  %s10 = scalar_select 0, %s9, %s7
  // Predicated region
  $region2: #{residual_forward.1} parent=0 // pred_check
    _
  $region3: #{residual_forward.1} parent=0 // pred_check_branch
    %12 = sbr.rel (0) target = $region5
  $region4: #{residual_forward.1} parent=0 // pred_region
    _
  $region5: #{residual_forward.1} parent=0 // pred_fallthru
    _
  // Predicated region
  $region6: #{residual_forward.1} parent=0 // pred_check
    _
  $region7: #{residual_forward.1} parent=0 // pred_check_branch
    %14 = sbr.rel (0) target = $region9
  $region8: #{residual_forward.1} parent=0 // pred_region
    _
  $region9: #{residual_forward.1} parent=0 // pred_fallthru
    _
  // Predicated region
  $region10: #{residual_forward.1} parent=0 // pred_check
    _
  $region11: #{residual_forward.1} parent=0 // pred_check_branch
    %16 = sbr.rel (0) target = $region13
  $region12: #{residual_forward.1} parent=0 // pred_region
    _
  $region13: #{residual_forward.1} parent=0 // pred_fallthru
    _
  // Predicated region
  $region14: #{residual_forward.1} parent=0 // pred_check
    _
  $region15: #{residual_forward.1} parent=0 // pred_check_branch
    %18 = sbr.rel (0) target = $region17
  $region16: #{residual_forward.1} parent=0 // pred_region
    _
  $region17: #{residual_forward.1} parent=0 // pred_fallthru
    _
  // Predicated region
  $region18: #{residual_forward.1} parent=0 // pred_check
    _
  $region19: #{residual_forward.1} parent=0 // pred_check_branch
    %20 = sbr.rel (0) target = $region21
  $region20: #{residual_forward.1} parent=0 // pred_region
    _
  $region21: #{residual_forward.1} parent=0 // pred_fallthru
    _
  // Predicated region
  $region22: #{residual_forward.1} parent=0 // pred_check
    _
  $region23: #{residual_forward.1} parent=0 // pred_check_branch
    %22 = sbr.rel (0) target = $region25
  $region24: #{residual_forward.1} parent=0 // pred_region
    _
  $region25: #{residual_forward.1} parent=0 // pred_fallthru
    _
  %v23 = vld [vmem:[%s1] sm:$0xf]
  %v24 = vld [vmem:[%s2] sm:$0xf]
  %v25 = vld [vmem:[%s3] sm:$0xf]
  %v26 = vld [vmem:[%s4] sm:$0xf]
  %v27 = vld [vmem:[%s5] sm:$0xf]
  %v28 = vld [vmem:[%s0] sm:$0xff]
  %30 = vst [vmem:[#allocation1] ss:$2 sm:$0xff] %v28
  %v31 = vld.sshfl [vmem:[#allocation1] sm:$0xff pattern:$0x75316420]
  %v32 = vld.sshfl [vmem:[#allocation1 + $0x8] sm:$0xff pattern:$0x75316420]
  %33 = vrot.lane.b32.xlu0 %v31, 17
  %v34 = vpop.permute.xlu0 %33
  %35 = vrot.lane.b32.xlu0 %v32, 17
  %v36 = vpop.permute.xlu0 %35
  %vm37 = vcmask 138240
  %v38 = vsel %vm37, %v34, %v36
  %v42 = vsel %vm37, 0.0, %v34
  %v43 = vsel %vm37, %v36, 0.0
  %v45 = vperm.slane %v23, 0
  %v46 = vperm.slane %v23, 2
  %v49 = vperm.slane %v45, 0
  %v50 = vperm.slane %v46, 0
  %v51 = vmul.f32 %v42, %v49
  %v52 = vmul.f32 %v38, %v50
  %v53 = vperm.slane %v23, 1
  %v54 = vperm.slane %v23, 3
  %v57 = vperm.slane %v53, 1
  %v58 = vperm.slane %v54, 1
  %61 = vrot.lane.b32.xlu0 %v57, 2
  %v62 = vpop.permute.xlu0 %61
  %63 = vrot.lane.b32.xlu0 %v58, 2
  %v64 = vpop.permute.xlu0 %63
  %vm65 = vcmask 15360
  %v66 = vsel %vm65, %v62, %v64
  %v70 = vmul.f32 %v42, %v62
  %v71 = vmul.f32 %v38, %v66
  %v72 = vmul.f32 %v43, %v64
  %75 = vrot.lane.b32.xlu0 %v49, 16
  %v76 = vpop.permute.xlu0 %75
  %77 = vrot.lane.b32.xlu0 %v50, 16
  %v78 = vpop.permute.xlu0 %77
  %vm79 = vcmask 130048
  %v80 = vsel %vm79, %v76, %v78
  %v84 = vmul.f32 %v42, %v76
  %v85 = vmul.f32 %v38, %v80
  %v86 = vmul.f32 %v43, %v78
  %87 = vrot.lane.b32.xlu0 %v57, 18
  %v88 = vpop.permute.xlu0 %87
  %89 = vrot.lane.b32.xlu0 %v58, 18
  %v90 = vpop.permute.xlu0 %89
  %vm91 = vcmask 146432
  %v92 = vsel %vm91, %v88, %v90
  %v96 = vmul.f32 %v42, %v88
  %v97 = vmul.f32 %v38, %v92
  %v98 = vmul.f32 %v43, %v90
  %99 = vrot.lane.b32.xlu0 %v49, 32
  %v100 = vpop.permute.xlu0 %99
  %101 = vrot.lane.b32.xlu0 %v50, 32
  %v102 = vpop.permute.xlu0 %101
  %vm103 = vcmask 261120
  %v104 = vsel %vm103, %v100, %v102
  %v108 = vmul.f32 %v42, %v100
  %v109 = vmul.f32 %v38, %v104
  %v110 = vmul.f32 %v43, %v102
  %111 = vrot.lane.b32.xlu0 %v57, 34
  %v112 = vpop.permute.xlu0 %111
  %113 = vrot.lane.b32.xlu0 %v58, 34
  %v114 = vpop.permute.xlu0 %113
  %vm115 = vcmask 277504
  %v116 = vsel %vm115, %v112, %v114
  %v120 = vmul.f32 %v42, %v112
  %v121 = vmul.f32 %v38, %v116
  %v122 = vmul.f32 %v43, %v114
  %v125 = vrot.slane %v42, 4
  %v126 = vrot.slane %v38, 4
  %v127 = vrot.slane %v43, 4
  %128 = vrot.lane.b32.xlu0 %v125, 127
  %v129 = vpop.permute.xlu0 %128
  %130 = vrot.lane.b32.xlu0 %v126, 127
  %v131 = vpop.permute.xlu0 %130
  %132 = vrot.lane.b32.xlu0 %v127, 127
  %v133 = vpop.permute.xlu0 %132
  %vm134 = vcmask 1039360
  %v135 = vsel %vm134, %v129, %v131
  %v136 = vsel %vm134, %v131, %v133
  %142 = vrot.lane.b32.xlu0 %v70, 126
  %v143 = vpop.permute.xlu0 %142
  %144 = vrot.lane.b32.xlu0 %v71, 126
  %v145 = vpop.permute.xlu0 %144
  %146 = vrot.lane.b32.xlu0 %v72, 126
  %v147 = vpop.permute.xlu0 %146
  %vm148 = vcmask 1031168
  %v149 = vsel %vm148, %v143, %v145
  %v150 = vsel %vm148, %v145, %v147
  %v156 = vrot.slane %v84, 4
  %v157 = vrot.slane %v85, 4
  %v158 = vrot.slane %v86, 4
  %159 = vrot.lane.b32.xlu0 %v156, 112
  %v160 = vpop.permute.xlu0 %159
  %161 = vrot.lane.b32.xlu0 %v157, 112
  %v162 = vpop.permute.xlu0 %161
  %163 = vrot.lane.b32.xlu0 %v158, 112
  %v164 = vpop.permute.xlu0 %163
  %vm165 = vcmask 916480
  %v166 = vsel %vm165, %v160, %v162
  %v167 = vsel %vm165, %v162, %v164
  %170 = vrot.lane.b32.xlu0 %v42, 111
  %v171 = vpop.permute.xlu0 %170
  %172 = vrot.lane.b32.xlu0 %v38, 111
  %v173 = vpop.permute.xlu0 %172
  %174 = vrot.lane.b32.xlu0 %v43, 111
  %v175 = vpop.permute.xlu0 %174
  %vm176 = vcmask 908288
  %v177 = vsel %vm176, %v171, %v173
  %v178 = vsel %vm176, %v173, %v175
  %v184 = vrot.slane %v96, 4
  %v185 = vrot.slane %v97, 4
  %v186 = vrot.slane %v98, 4
  %187 = vrot.lane.b32.xlu0 %v184, 110
  %v188 = vpop.permute.xlu0 %187
  %189 = vrot.lane.b32.xlu0 %v185, 110
  %v190 = vpop.permute.xlu0 %189
  %191 = vrot.lane.b32.xlu0 %v186, 110
  %v192 = vpop.permute.xlu0 %191
  %vm193 = vcmask 900096
  %v194 = vsel %vm193, %v188, %v190
  %v195 = vsel %vm193, %v190, %v192
  %201 = vrot.lane.b32.xlu0 %v108, 96
  %v202 = vpop.permute.xlu0 %201
  %203 = vrot.lane.b32.xlu0 %v109, 96
  %v204 = vpop.permute.xlu0 %203
  %205 = vrot.lane.b32.xlu0 %v110, 96
  %v206 = vpop.permute.xlu0 %205
  %vm207 = vcmask 785408
  %v208 = vsel %vm207, %v202, %v204
  %v209 = vsel %vm207, %v204, %v206
  %212 = vrot.lane.b32.xlu0 %v125, 95
  %v213 = vpop.permute.xlu0 %212
  %214 = vrot.lane.b32.xlu0 %v126, 95
  %v215 = vpop.permute.xlu0 %214
  %216 = vrot.lane.b32.xlu0 %v127, 95
  %v217 = vpop.permute.xlu0 %216
  %vm218 = vcmask 777216
  %v219 = vsel %vm218, %v213, %v215
  %v220 = vsel %vm218, %v215, %v217
  %226 = vrot.lane.b32.xlu0 %v120, 94
  %v227 = vpop.permute.xlu0 %226
  %228 = vrot.lane.b32.xlu0 %v121, 94
  %v229 = vpop.permute.xlu0 %228
  %230 = vrot.lane.b32.xlu0 %v122, 94
  %v231 = vpop.permute.xlu0 %230
  %vm232 = vcmask 769024
  %v233 = vsel %vm232, %v227, %v229
  %v234 = vsel %vm232, %v229, %v231
  %vm235 = vcmask 1043456
  %v236 = vsel %vm235, %v51, %v135
  %v237 = vsel %vm235, %v52, %v136
  %v238 = vsel %vm235, %v149, %v166
  %v239 = vsel %vm235, %v150, %v167
  %v240 = vsel %vm235, %v177, %v194
  %v241 = vsel %vm235, %v178, %v195
  %v242 = vsel %vm235, %v208, %v219
  %v243 = vsel %vm235, %v209, %v220
  %245 = vset.pattern.permute.xlu0 0
  %246 = vperm.xlu0 %245, %v25
  %v247 = vpop.permute.xlu0 %246
  %vm249 = vcmask 293888
  %v251 = vsel %vm249, %v24, 0
  %v253 = vsel %vm235, %v233, 0
  %v255 = vsel %vm235, %v234, 0
  %257 = vmatpush.msra.mxu0 0.0
  %258 = vmatpush.msra.mxu0 0.0
  %259 = vmatpush.msra.mxu0 0.0
  %260 = vmatpush.msra.mxu0 0.0
  %261 = vmatpush.msra.mxu0 0.0
  %262 = vmatpush.msra.mxu0 0.0
  %263 = vmatpush.msra.mxu0 0.0
  %264 = vmatpush.msra.mxu0 0.0
  %265 = vmatpush.msra.mxu0 0.0
  %266 = vmatpush.msra.mxu0 0.0
  %267 = vmatpush.msra.mxu0 0.0
  %268 = vmatpush.msra.mxu0 %v253
  %269 = vmatpush.msra.mxu0 %v242
  %270 = vmatpush.msra.mxu0 %v240
  %271 = vmatpush.msra.mxu0 %v238
  %272 = vmatpush.msra.mxu0 %v236
  %273 = vmatmul.f32.gmra.mxu0 %v251
  %v274 = vpop.f32.mrf.mxu0
  %v275 = vadd.f32 %v247, %v274
  %276 = vdwg.mxu0
  %277 = vmatpush.msra.mxu0 0.0
  %278 = vmatpush.msra.mxu0 0.0
  %279 = vmatpush.msra.mxu0 0.0
  %280 = vmatpush.msra.mxu0 0.0
  %281 = vmatpush.msra.mxu0 0.0
  %282 = vmatpush.msra.mxu0 0.0
  %283 = vmatpush.msra.mxu0 0.0
  %284 = vmatpush.msra.mxu0 0.0
  %285 = vmatpush.msra.mxu0 0.0
  %286 = vmatpush.msra.mxu0 0.0
  %287 = vmatpush.msra.mxu0 0.0
  %288 = vmatpush.msra.mxu0 %v255
  %289 = vmatpush.msra.mxu0 %v243
  %290 = vmatpush.msra.mxu0 %v241
  %291 = vmatpush.msra.mxu0 %v239
  %292 = vmatpush.msra.mxu0 %v237
  %293 = vmatmul.f32.gmra.mxu0 %v251
  %v294 = vpop.f32.mrf.mxu0
  %v295 = vadd.f32 %v247, %v294
  %296 = vdwg.mxu0
  %v297 = vmax.f32 %v275, 0.0
  %v298 = vmax.f32 %v295, 0.0
  %301 = vrot.lane.b32.xlu0 %v297, 17
  %v302 = vpop.permute.xlu0 %301
  %303 = vrot.lane.b32.xlu0 %v298, 17
  %v304 = vpop.permute.xlu0 %303
  %v305 = vsel %vm37, %v302, %v304
  %v309 = vsel %vm37, 0.0, %v302
  %v310 = vsel %vm37, %v304, 0.0
  %v311 = vmul.f32 %v309, %v49
  %v312 = vmul.f32 %v305, %v50
  %v313 = vmul.f32 %v309, %v62
  %v314 = vmul.f32 %v305, %v66
  %v315 = vmul.f32 %v310, %v64
  %v316 = vmul.f32 %v309, %v76
  %v317 = vmul.f32 %v305, %v80
  %v318 = vmul.f32 %v310, %v78
  %v319 = vmul.f32 %v309, %v88
  %v320 = vmul.f32 %v305, %v92
  %v321 = vmul.f32 %v310, %v90
  %v322 = vmul.f32 %v309, %v100
  %v323 = vmul.f32 %v305, %v104
  %v324 = vmul.f32 %v310, %v102
  %v325 = vmul.f32 %v309, %v112
  %v326 = vmul.f32 %v305, %v116
  %v327 = vmul.f32 %v310, %v114
  %v330 = vrot.slane %v309, 4
  %v331 = vrot.slane %v305, 4
  %v332 = vrot.slane %v310, 4
  %333 = vrot.lane.b32.xlu0 %v330, 127
  %v334 = vpop.permute.xlu0 %333
  %335 = vrot.lane.b32.xlu0 %v331, 127
  %v336 = vpop.permute.xlu0 %335
  %337 = vrot.lane.b32.xlu0 %v332, 127
  %v338 = vpop.permute.xlu0 %337
  %v339 = vsel %vm134, %v334, %v336
  %v340 = vsel %vm134, %v336, %v338
  %346 = vrot.lane.b32.xlu0 %v313, 126
  %v347 = vpop.permute.xlu0 %346
  %348 = vrot.lane.b32.xlu0 %v314, 126
  %v349 = vpop.permute.xlu0 %348
  %350 = vrot.lane.b32.xlu0 %v315, 126
  %v351 = vpop.permute.xlu0 %350
  %v352 = vsel %vm148, %v347, %v349
  %v353 = vsel %vm148, %v349, %v351
  %v359 = vrot.slane %v316, 4
  %v360 = vrot.slane %v317, 4
  %v361 = vrot.slane %v318, 4
  %362 = vrot.lane.b32.xlu0 %v359, 112
  %v363 = vpop.permute.xlu0 %362
  %364 = vrot.lane.b32.xlu0 %v360, 112
  %v365 = vpop.permute.xlu0 %364
  %366 = vrot.lane.b32.xlu0 %v361, 112
  %v367 = vpop.permute.xlu0 %366
  %v368 = vsel %vm165, %v363, %v365
  %v369 = vsel %vm165, %v365, %v367
  %372 = vrot.lane.b32.xlu0 %v309, 111
  %v373 = vpop.permute.xlu0 %372
  %374 = vrot.lane.b32.xlu0 %v305, 111
  %v375 = vpop.permute.xlu0 %374
  %376 = vrot.lane.b32.xlu0 %v310, 111
  %v377 = vpop.permute.xlu0 %376
  %v378 = vsel %vm176, %v373, %v375
  %v379 = vsel %vm176, %v375, %v377
  %v385 = vrot.slane %v319, 4
  %v386 = vrot.slane %v320, 4
  %v387 = vrot.slane %v321, 4
  %388 = vrot.lane.b32.xlu0 %v385, 110
  %v389 = vpop.permute.xlu0 %388
  %390 = vrot.lane.b32.xlu0 %v386, 110
  %v391 = vpop.permute.xlu0 %390
  %392 = vrot.lane.b32.xlu0 %v387, 110
  %v393 = vpop.permute.xlu0 %392
  %v394 = vsel %vm193, %v389, %v391
  %v395 = vsel %vm193, %v391, %v393
  %401 = vrot.lane.b32.xlu0 %v322, 96
  %v402 = vpop.permute.xlu0 %401
  %403 = vrot.lane.b32.xlu0 %v323, 96
  %v404 = vpop.permute.xlu0 %403
  %405 = vrot.lane.b32.xlu0 %v324, 96
  %v406 = vpop.permute.xlu0 %405
  %v407 = vsel %vm207, %v402, %v404
  %v408 = vsel %vm207, %v404, %v406
  %411 = vrot.lane.b32.xlu0 %v330, 95
  %v412 = vpop.permute.xlu0 %411
  %413 = vrot.lane.b32.xlu0 %v331, 95
  %v414 = vpop.permute.xlu0 %413
  %415 = vrot.lane.b32.xlu0 %v332, 95
  %v416 = vpop.permute.xlu0 %415
  %v417 = vsel %vm218, %v412, %v414
  %v418 = vsel %vm218, %v414, %v416
  %424 = vrot.lane.b32.xlu0 %v325, 94
  %v425 = vpop.permute.xlu0 %424
  %426 = vrot.lane.b32.xlu0 %v326, 94
  %v427 = vpop.permute.xlu0 %426
  %428 = vrot.lane.b32.xlu0 %v327, 94
  %v429 = vpop.permute.xlu0 %428
  %v430 = vsel %vm232, %v425, %v427
  %v431 = vsel %vm232, %v427, %v429
  %v432 = vsel %vm235, %v311, %v339
  %v433 = vsel %vm235, %v312, %v340
  %v434 = vsel %vm235, %v352, %v368
  %v435 = vsel %vm235, %v353, %v369
  %v436 = vsel %vm235, %v378, %v394
  %v437 = vsel %vm235, %v379, %v395
  %v438 = vsel %vm235, %v407, %v417
  %v439 = vsel %vm235, %v408, %v418
  %441 = vset.pattern.permute.xlu0 0
  %442 = vperm.xlu0 %441, %v27
  %v443 = vpop.permute.xlu0 %442
  %v446 = vsel %vm249, %v26, 0
  %v448 = vsel %vm235, %v430, 0
  %v450 = vsel %vm235, %v431, 0
  %452 = vmatpush.msra.mxu0 0.0
  %453 = vmatpush.msra.mxu0 0.0
  %454 = vmatpush.msra.mxu0 0.0
  %455 = vmatpush.msra.mxu0 0.0
  %456 = vmatpush.msra.mxu0 0.0
  %457 = vmatpush.msra.mxu0 0.0
  %458 = vmatpush.msra.mxu0 0.0
  %459 = vmatpush.msra.mxu0 0.0
  %460 = vmatpush.msra.mxu0 0.0
  %461 = vmatpush.msra.mxu0 0.0
  %462 = vmatpush.msra.mxu0 0.0
  %463 = vmatpush.msra.mxu0 %v448
  %464 = vmatpush.msra.mxu0 %v438
  %465 = vmatpush.msra.mxu0 %v436
  %466 = vmatpush.msra.mxu0 %v434
  %467 = vmatpush.msra.mxu0 %v432
  %468 = vmatmul.f32.gmra.mxu0 %v446
  %v469 = vpop.f32.mrf.mxu0
  %v470 = vadd.f32 %v443, %v469
  %471 = vdwg.mxu0
  %472 = vmatpush.msra.mxu0 0.0
  %473 = vmatpush.msra.mxu0 0.0
  %474 = vmatpush.msra.mxu0 0.0
  %475 = vmatpush.msra.mxu0 0.0
  %476 = vmatpush.msra.mxu0 0.0
  %477 = vmatpush.msra.mxu0 0.0
  %478 = vmatpush.msra.mxu0 0.0
  %479 = vmatpush.msra.mxu0 0.0
  %480 = vmatpush.msra.mxu0 0.0
  %481 = vmatpush.msra.mxu0 0.0
  %482 = vmatpush.msra.mxu0 0.0
  %483 = vmatpush.msra.mxu0 %v450
  %484 = vmatpush.msra.mxu0 %v439
  %485 = vmatpush.msra.mxu0 %v437
  %486 = vmatpush.msra.mxu0 %v435
  %487 = vmatpush.msra.mxu0 %v433
  %488 = vmatmul.f32.gmra.mxu0 %v446
  %v489 = vpop.f32.mrf.mxu0
  %v490 = vadd.f32 %v443, %v489
  %491 = vdwg.mxu0
  %492 = vst [vmem:[#allocation1] ss:$2 sm:$0xff] %v28
  %v493 = vld.sshfl [vmem:[#allocation1] sm:$0xff pattern:$0x75316420]
  %v494 = vld.sshfl [vmem:[#allocation1 + $0x8] sm:$0xff pattern:$0x75316420]
  %v497 = vadd.f32 %v470, %v493
  %v498 = vadd.f32 %v490, %v494
  %v499 = vmax.f32 %v497, 0.0
  %v500 = vmax.f32 %v498, 0.0
  %v503 = vrot.slane %v500, 4
  %v504 = vsel %vm235, %v499, %v503
  %506 = vst [vmem:[%s6] sm:$0xff] %v504
  %s507 = scalar_lea.vmem %s0, 8
  %v508 = vld [vmem:[%s507] sm:$0xff]
  %510 = vst [vmem:[#allocation1] ss:$2 sm:$0xff] %v508
  %v511 = vld.sshfl [vmem:[#allocation1] sm:$0xff pattern:$0x75316420]
  %v512 = vld.sshfl [vmem:[#allocation1 + $0x8] sm:$0xff pattern:$0x75316420]
  %513 = vrot.lane.b32.xlu0 %v511, 17
  %v514 = vpop.permute.xlu0 %513
  %515 = vrot.lane.b32.xlu0 %v512, 17
  %v516 = vpop.permute.xlu0 %515
  %v517 = vsel %vm37, %v514, %v516
  %v521 = vsel %vm37, 0.0, %v514
  %v522 = vsel %vm37, %v516, 0.0
  %v523 = vmul.f32 %v521, %v49
  %v524 = vmul.f32 %v517, %v50
  %v525 = vmul.f32 %v521, %v62
  %v526 = vmul.f32 %v517, %v66
  %v527 = vmul.f32 %v522, %v64
  %v528 = vmul.f32 %v521, %v76
  %v529 = vmul.f32 %v517, %v80
  %v530 = vmul.f32 %v522, %v78
  %v531 = vmul.f32 %v521, %v88
  %v532 = vmul.f32 %v517, %v92
  %v533 = vmul.f32 %v522, %v90
  %v534 = vmul.f32 %v521, %v100
  %v535 = vmul.f32 %v517, %v104
  %v536 = vmul.f32 %v522, %v102
  %v537 = vmul.f32 %v521, %v112
  %v538 = vmul.f32 %v517, %v116
  %v539 = vmul.f32 %v522, %v114
  %v542 = vrot.slane %v521, 4
  %v543 = vrot.slane %v517, 4
  %v544 = vrot.slane %v522, 4
  %545 = vrot.lane.b32.xlu0 %v542, 127
  %v546 = vpop.permute.xlu0 %545
  %547 = vrot.lane.b32.xlu0 %v543, 127
  %v548 = vpop.permute.xlu0 %547
  %549 = vrot.lane.b32.xlu0 %v544, 127
  %v550 = vpop.permute.xlu0 %549
  %v551 = vsel %vm134, %v546, %v548
  %v552 = vsel %vm134, %v548, %v550
  %558 = vrot.lane.b32.xlu0 %v525, 126
  %v559 = vpop.permute.xlu0 %558
  %560 = vrot.lane.b32.xlu0 %v526, 126
  %v561 = vpop.permute.xlu0 %560
  %562 = vrot.lane.b32.xlu0 %v527, 126
  %v563 = vpop.permute.xlu0 %562
  %v564 = vsel %vm148, %v559, %v561
  %v565 = vsel %vm148, %v561, %v563
  %v571 = vrot.slane %v528, 4
  %v572 = vrot.slane %v529, 4
  %v573 = vrot.slane %v530, 4
  %574 = vrot.lane.b32.xlu0 %v571, 112
  %v575 = vpop.permute.xlu0 %574
  %576 = vrot.lane.b32.xlu0 %v572, 112
  %v577 = vpop.permute.xlu0 %576
  %578 = vrot.lane.b32.xlu0 %v573, 112
  %v579 = vpop.permute.xlu0 %578
  %v580 = vsel %vm165, %v575, %v577
  %v581 = vsel %vm165, %v577, %v579
  %584 = vrot.lane.b32.xlu0 %v521, 111
  %v585 = vpop.permute.xlu0 %584
  %586 = vrot.lane.b32.xlu0 %v517, 111
  %v587 = vpop.permute.xlu0 %586
  %588 = vrot.lane.b32.xlu0 %v522, 111
  %v589 = vpop.permute.xlu0 %588
  %v590 = vsel %vm176, %v585, %v587
  %v591 = vsel %vm176, %v587, %v589
  %v597 = vrot.slane %v531, 4
  %v598 = vrot.slane %v532, 4
  %v599 = vrot.slane %v533, 4
  %600 = vrot.lane.b32.xlu0 %v597, 110
  %v601 = vpop.permute.xlu0 %600
  %602 = vrot.lane.b32.xlu0 %v598, 110
  %v603 = vpop.permute.xlu0 %602
  %604 = vrot.lane.b32.xlu0 %v599, 110
  %v605 = vpop.permute.xlu0 %604
  %v606 = vsel %vm193, %v601, %v603
  %v607 = vsel %vm193, %v603, %v605
  %613 = vrot.lane.b32.xlu0 %v534, 96
  %v614 = vpop.permute.xlu0 %613
  %615 = vrot.lane.b32.xlu0 %v535, 96
  %v616 = vpop.permute.xlu0 %615
  %617 = vrot.lane.b32.xlu0 %v536, 96
  %v618 = vpop.permute.xlu0 %617
  %v619 = vsel %vm207, %v614, %v616
  %v620 = vsel %vm207, %v616, %v618
  %623 = vrot.lane.b32.xlu0 %v542, 95
  %v624 = vpop.permute.xlu0 %623
  %625 = vrot.lane.b32.xlu0 %v543, 95
  %v626 = vpop.permute.xlu0 %625
  %627 = vrot.lane.b32.xlu0 %v544, 95
  %v628 = vpop.permute.xlu0 %627
  %v629 = vsel %vm218, %v624, %v626
  %v630 = vsel %vm218, %v626, %v628
  %636 = vrot.lane.b32.xlu0 %v537, 94
  %v637 = vpop.permute.xlu0 %636
  %638 = vrot.lane.b32.xlu0 %v538, 94
  %v639 = vpop.permute.xlu0 %638
  %640 = vrot.lane.b32.xlu0 %v539, 94
  %v641 = vpop.permute.xlu0 %640
  %v642 = vsel %vm232, %v637, %v639
  %v643 = vsel %vm232, %v639, %v641
  %v644 = vsel %vm235, %v523, %v551
  %v645 = vsel %vm235, %v524, %v552
  %v646 = vsel %vm235, %v564, %v580
  %v647 = vsel %vm235, %v565, %v581
  %v648 = vsel %vm235, %v590, %v606
  %v649 = vsel %vm235, %v591, %v607
  %v650 = vsel %vm235, %v619, %v629
  %v651 = vsel %vm235, %v620, %v630
  %v652 = vsel %vm235, %v642, 0
  %v654 = vsel %vm235, %v643, 0
  %656 = vmatpush.msra.mxu0 0.0
  %657 = vmatpush.msra.mxu0 0.0
  %658 = vmatpush.msra.mxu0 0.0
  %659 = vmatpush.msra.mxu0 0.0
  %660 = vmatpush.msra.mxu0 0.0
  %661 = vmatpush.msra.mxu0 0.0
  %662 = vmatpush.msra.mxu0 0.0
  %663 = vmatpush.msra.mxu0 0.0
  %664 = vmatpush.msra.mxu0 0.0
  %665 = vmatpush.msra.mxu0 0.0
  %666 = vmatpush.msra.mxu0 0.0
  %667 = vmatpush.msra.mxu0 %v652
  %668 = vmatpush.msra.mxu0 %v650
  %669 = vmatpush.msra.mxu0 %v648
  %670 = vmatpush.msra.mxu0 %v646
  %671 = vmatpush.msra.mxu0 %v644
  %672 = vmatmul.f32.gmra.mxu0 %v251
  %v673 = vpop.f32.mrf.mxu0
  %v674 = vadd.f32 %v247, %v673
  %675 = vdwg.mxu0
  %676 = vmatpush.msra.mxu0 0.0
  %677 = vmatpush.msra.mxu0 0.0
  %678 = vmatpush.msra.mxu0 0.0
  %679 = vmatpush.msra.mxu0 0.0
  %680 = vmatpush.msra.mxu0 0.0
  %681 = vmatpush.msra.mxu0 0.0
  %682 = vmatpush.msra.mxu0 0.0
  %683 = vmatpush.msra.mxu0 0.0
  %684 = vmatpush.msra.mxu0 0.0
  %685 = vmatpush.msra.mxu0 0.0
  %686 = vmatpush.msra.mxu0 0.0
  %687 = vmatpush.msra.mxu0 %v654
  %688 = vmatpush.msra.mxu0 %v651
  %689 = vmatpush.msra.mxu0 %v649
  %690 = vmatpush.msra.mxu0 %v647
  %691 = vmatpush.msra.mxu0 %v645
  %692 = vmatmul.f32.gmra.mxu0 %v251
  %v693 = vpop.f32.mrf.mxu0
  %v694 = vadd.f32 %v247, %v693
  %695 = vdwg.mxu0
  %v696 = vmax.f32 %v674, 0.0
  %v697 = vmax.f32 %v694, 0.0
  %700 = vrot.lane.b32.xlu0 %v696, 17
  %v701 = vpop.permute.xlu0 %700
  %702 = vrot.lane.b32.xlu0 %v697, 17
  %v703 = vpop.permute.xlu0 %702
  %v704 = vsel %vm37, %v701, %v703
  %v708 = vsel %vm37, 0.0, %v701
  %v709 = vsel %vm37, %v703, 0.0
  %v710 = vmul.f32 %v708, %v49
  %v711 = vmul.f32 %v704, %v50
  %v712 = vmul.f32 %v708, %v62
  %v713 = vmul.f32 %v704, %v66
  %v714 = vmul.f32 %v709, %v64
  %v715 = vmul.f32 %v708, %v76
  %v716 = vmul.f32 %v704, %v80
  %v717 = vmul.f32 %v709, %v78
  %v718 = vmul.f32 %v708, %v88
  %v719 = vmul.f32 %v704, %v92
  %v720 = vmul.f32 %v709, %v90
  %v721 = vmul.f32 %v708, %v100
  %v722 = vmul.f32 %v704, %v104
  %v723 = vmul.f32 %v709, %v102
  %v724 = vmul.f32 %v708, %v112
  %v725 = vmul.f32 %v704, %v116
  %v726 = vmul.f32 %v709, %v114
  %v729 = vrot.slane %v708, 4
  %v730 = vrot.slane %v704, 4
  %v731 = vrot.slane %v709, 4
  %732 = vrot.lane.b32.xlu0 %v729, 127
  %v733 = vpop.permute.xlu0 %732
  %734 = vrot.lane.b32.xlu0 %v730, 127
  %v735 = vpop.permute.xlu0 %734
  %736 = vrot.lane.b32.xlu0 %v731, 127
  %v737 = vpop.permute.xlu0 %736
  %v738 = vsel %vm134, %v733, %v735
  %v739 = vsel %vm134, %v735, %v737
  %745 = vrot.lane.b32.xlu0 %v712, 126
  %v746 = vpop.permute.xlu0 %745
  %747 = vrot.lane.b32.xlu0 %v713, 126
  %v748 = vpop.permute.xlu0 %747
  %749 = vrot.lane.b32.xlu0 %v714, 126
  %v750 = vpop.permute.xlu0 %749
  %v751 = vsel %vm148, %v746, %v748
  %v752 = vsel %vm148, %v748, %v750
  %v758 = vrot.slane %v715, 4
  %v759 = vrot.slane %v716, 4
  %v760 = vrot.slane %v717, 4
  %761 = vrot.lane.b32.xlu0 %v758, 112
  %v762 = vpop.permute.xlu0 %761
  %763 = vrot.lane.b32.xlu0 %v759, 112
  %v764 = vpop.permute.xlu0 %763
  %765 = vrot.lane.b32.xlu0 %v760, 112
  %v766 = vpop.permute.xlu0 %765
  %v767 = vsel %vm165, %v762, %v764
  %v768 = vsel %vm165, %v764, %v766
  %771 = vrot.lane.b32.xlu0 %v708, 111
  %v772 = vpop.permute.xlu0 %771
  %773 = vrot.lane.b32.xlu0 %v704, 111
  %v774 = vpop.permute.xlu0 %773
  %775 = vrot.lane.b32.xlu0 %v709, 111
  %v776 = vpop.permute.xlu0 %775
  %v777 = vsel %vm176, %v772, %v774
  %v778 = vsel %vm176, %v774, %v776
  %v784 = vrot.slane %v718, 4
  %v785 = vrot.slane %v719, 4
  %v786 = vrot.slane %v720, 4
  %787 = vrot.lane.b32.xlu0 %v784, 110
  %v788 = vpop.permute.xlu0 %787
  %789 = vrot.lane.b32.xlu0 %v785, 110
  %v790 = vpop.permute.xlu0 %789
  %791 = vrot.lane.b32.xlu0 %v786, 110
  %v792 = vpop.permute.xlu0 %791
  %v793 = vsel %vm193, %v788, %v790
  %v794 = vsel %vm193, %v790, %v792
  %800 = vrot.lane.b32.xlu0 %v721, 96
  %v801 = vpop.permute.xlu0 %800
  %802 = vrot.lane.b32.xlu0 %v722, 96
  %v803 = vpop.permute.xlu0 %802
  %804 = vrot.lane.b32.xlu0 %v723, 96
  %v805 = vpop.permute.xlu0 %804
  %v806 = vsel %vm207, %v801, %v803
  %v807 = vsel %vm207, %v803, %v805
  %810 = vrot.lane.b32.xlu0 %v729, 95
  %v811 = vpop.permute.xlu0 %810
  %812 = vrot.lane.b32.xlu0 %v730, 95
  %v813 = vpop.permute.xlu0 %812
  %814 = vrot.lane.b32.xlu0 %v731, 95
  %v815 = vpop.permute.xlu0 %814
  %v816 = vsel %vm218, %v811, %v813
  %v817 = vsel %vm218, %v813, %v815
  %823 = vrot.lane.b32.xlu0 %v724, 94
  %v824 = vpop.permute.xlu0 %823
  %825 = vrot.lane.b32.xlu0 %v725, 94
  %v826 = vpop.permute.xlu0 %825
  %827 = vrot.lane.b32.xlu0 %v726, 94
  %v828 = vpop.permute.xlu0 %827
  %v829 = vsel %vm232, %v824, %v826
  %v830 = vsel %vm232, %v826, %v828
  %v831 = vsel %vm235, %v710, %v738
  %v832 = vsel %vm235, %v711, %v739
  %v833 = vsel %vm235, %v751, %v767
  %v834 = vsel %vm235, %v752, %v768
  %v835 = vsel %vm235, %v777, %v793
  %v836 = vsel %vm235, %v778, %v794
  %v837 = vsel %vm235, %v806, %v816
  %v838 = vsel %vm235, %v807, %v817
  %v839 = vsel %vm235, %v829, 0
  %v841 = vsel %vm235, %v830, 0
  %843 = vmatpush.msra.mxu0 0.0
  %844 = vmatpush.msra.mxu0 0.0
  %845 = vmatpush.msra.mxu0 0.0
  %846 = vmatpush.msra.mxu0 0.0
  %847 = vmatpush.msra.mxu0 0.0
  %848 = vmatpush.msra.mxu0 0.0
  %849 = vmatpush.msra.mxu0 0.0
  %850 = vmatpush.msra.mxu0 0.0
  %851 = vmatpush.msra.mxu0 0.0
  %852 = vmatpush.msra.mxu0 0.0
  %853 = vmatpush.msra.mxu0 0.0
  %854 = vmatpush.msra.mxu0 %v839
  %855 = vmatpush.msra.mxu0 %v837
  %856 = vmatpush.msra.mxu0 %v835
  %857 = vmatpush.msra.mxu0 %v833
  %858 = vmatpush.msra.mxu0 %v831
  %859 = vmatmul.f32.gmra.mxu0 %v446
  %v860 = vpop.f32.mrf.mxu0
  %v861 = vadd.f32 %v443, %v860
  %862 = vdwg.mxu0
  %863 = vmatpush.msra.mxu0 0.0
  %864 = vmatpush.msra.mxu0 0.0
  %865 = vmatpush.msra.mxu0 0.0
  %866 = vmatpush.msra.mxu0 0.0
  %867 = vmatpush.msra.mxu0 0.0
  %868 = vmatpush.msra.mxu0 0.0
  %869 = vmatpush.msra.mxu0 0.0
  %870 = vmatpush.msra.mxu0 0.0
  %871 = vmatpush.msra.mxu0 0.0
  %872 = vmatpush.msra.mxu0 0.0
  %873 = vmatpush.msra.mxu0 0.0
  %874 = vmatpush.msra.mxu0 %v841
  %875 = vmatpush.msra.mxu0 %v838
  %876 = vmatpush.msra.mxu0 %v836
  %877 = vmatpush.msra.mxu0 %v834
  %878 = vmatpush.msra.mxu0 %v832
  %879 = vmatmul.f32.gmra.mxu0 %v446
  %v880 = vpop.f32.mrf.mxu0
  %v881 = vadd.f32 %v443, %v880
  %882 = vdwg.mxu0
  %883 = vst [vmem:[#allocation1] ss:$2 sm:$0xff] %v508
  %v884 = vld.sshfl [vmem:[#allocation1] sm:$0xff pattern:$0x75316420]
  %v885 = vld.sshfl [vmem:[#allocation1 + $0x8] sm:$0xff pattern:$0x75316420]
  %v888 = vadd.f32 %v861, %v884
  %v889 = vadd.f32 %v881, %v885
  %v890 = vmax.f32 %v888, 0.0
  %v891 = vmax.f32 %v889, 0.0
  %v894 = vrot.slane %v891, 4
  %v895 = vsel %vm235, %v890, %v894
  %s897 = scalar_lea.vmem %s6, 8
  %898 = vst [vmem:[%s897] sm:$0xff] %v895
  // Predicated region
  $region26: #{residual_forward.1} parent=0 // pred_check
    _
  $region27: #{residual_forward.1} parent=0 // pred_check_branch
    %900 = sbr.rel (0) target = $region29
  $region28: #{residual_forward.1} parent=0 // pred_region
    _
  $region29: #{residual_forward.1} parent=0 // pred_fallthru
    _
  // Predicated region
  $region30: #{residual_forward.1} parent=0 // pred_check
    _
  $region31: #{residual_forward.1} parent=0 // pred_check_branch
    %902 = sbr.rel (0) target = $region33
  $region32: #{residual_forward.1} parent=0 // pred_region
    _
  $region33: #{residual_forward.1} parent=0 // pred_fallthru
    _

</llo_original>
